<compile_context>
chip_gen: v5e
topology: v5e:2x2
jax: 0.10.0
libtpu: 0.0.40
codegen_flags: <defaults>
</compile_context>

<pallas_src>
import jax
import jax.numpy as jnp
from jax.experimental import pallas as pl
from jax.experimental.pallas import tpu as pltpu

LANE = 128


def _round_up(n, m):
    return ((n + m - 1) // m) * m


# ----------------------------------------------------------------------------
# Kernel
# ----------------------------------------------------------------------------
def bottleneck1x1_kernel(
    x_ref,    # (tm, Cp)  bf16
    w1_ref,   # (Cp, Pp)  bf16, BN1 scale folded in
    b1_ref,   # (1, Pp)   f32
    w2_ref,   # (Pp, Pp)  bf16, BN2 scale folded in
    b2_ref,   # (1, Pp)   f32
    w3_ref,   # (Pp, Cp)  bf16, BN3 scale folded in
    b3_ref,   # (1, Cp)   f32
    o_ref,    # (tm, Cp)  bf16
):
    x = x_ref[...]  # already bf16 -> feeds MXU directly

    # conv1 (1x1) + bn1 + relu  -- bf16 MXU matmul, f32 accumulate.
    h = jnp.dot(x, w1_ref[...], preferred_element_type=jnp.float32)
    h = jnp.maximum(h + b1_ref[...], 0.0)

    # conv2 (1x1, stride=1) + bn2 + relu
    h = jnp.dot(h.astype(jnp.bfloat16), w2_ref[...],
                preferred_element_type=jnp.float32)
    h = jnp.maximum(h + b2_ref[...], 0.0)

    # conv3 (1x1) + bn3
    h = jnp.dot(h.astype(jnp.bfloat16), w3_ref[...],
                preferred_element_type=jnp.float32)
    h = h + b3_ref[...]

    # residual add + final relu in f32, store bf16
    o_ref[...] = jnp.maximum(h + x.astype(jnp.float32), 0.0).astype(o_ref.dtype)


# ----------------------------------------------------------------------------
# Host-side parameter preparation (run once)
# ----------------------------------------------------------------------------
def prepare_params(raw, eps=1e-5):
    """Fold BN (inference) into conv weights/bias, zero-pad channels to multiples
    of 128 (lane-dense, zeros so padded K columns are inert in the contraction),
    pre-cast weights to bf16."""
    (w1, bn1, w2, bn2, w3, bn3) = raw

    def fold(w, bn):
        gamma, beta, mean, var = bn
        scale = gamma / jnp.sqrt(var + eps)
        bias = beta - mean * scale
        return w * scale[None, :], bias

    w1f, b1 = fold(w1, bn1)
    w2f, b2 = fold(w2, bn2)
    w3f, b3 = fold(w3, bn3)

    c_in, p = w1f.shape
    c_out = w3f.shape[1]
    assert c_out == c_in, "residual add (downsample=None) needs inplanes == planes*expansion"
    c_pad = _round_up(c_in, LANE)
    p_pad = _round_up(p, LANE)

    def pad_w(w, rows, cols):
        return jnp.pad(w, ((0, rows - w.shape[0]), (0, cols - w.shape[1]))
                       ).astype(jnp.bfloat16)

    def pad_b(b, cols):
        return jnp.pad(b, (0, cols - b.shape[0])).reshape(1, cols).astype(jnp.float32)

    return dict(
        w1=pad_w(w1f, c_pad, p_pad), b1=pad_b(b1, p_pad),
        w2=pad_w(w2f, p_pad, p_pad), b2=pad_b(b2, p_pad),
        w3=pad_w(w3f, p_pad, c_pad), b3=pad_b(b3, c_pad),
        c_in=c_in, c_pad=c_pad, p_pad=p_pad,
    )


# ----------------------------------------------------------------------------
# Generation-aware defaults
# ----------------------------------------------------------------------------
def _physical_vmem_bytes():
    try:
        info = pltpu.get_tpu_info()
        return getattr(info, "vmem_capacity_bytes", None)
    except Exception:
        return None


def _default_dimension_semantics():
    # v7x has 2 TensorCores/chip: split the row grid across cores.  Plain
    # "parallel" vs "arbitrary" barely changes codegen, so only opt into
    # CORE_PARALLEL when the chip actually reports multiple TensorCores.
    try:
        info = pltpu.get_tpu_info()
        n_tc = (getattr(info, "num_tensorcores", None)
                or getattr(info, "tensorcores_per_chip", None) or 1)
        if int(n_tc) > 1:
            return (pltpu.CORE_PARALLEL,)
    except Exception:
        pass
    return ("parallel",)


def _pick_tm(M, Cp, tm):
    if tm is not None:
        return tm
    # Target ~2 MiB per bf16 x-block so the per-step DMA dwarfs the ~0.35 us
    # per-grid-step overhead even for narrow channels; cap at 2048 rows and by
    # the (rounded) number of rows so tiny inputs don't get huge row padding.
    target = 2 * 1024 * 1024
    t = max(256, min(2048, _round_up(max(1, target // (Cp * 2)), 256)))
    return min(t, max(256, _round_up(M, 256)))


def _vmem_budget(tm, Cp, Pp, x_buffers):
    act = (x_buffers + 2) * tm * Cp * 2               # x + out blocks (bf16)
    wts = (Cp * Pp + Pp * Pp + Pp * Cp) * 2           # single-buffered bf16 weights
    bias = (2 * Pp + Cp) * 4
    tmp = 3 * tm * max(Cp, Pp) * 4                    # f32 intermediates / residual
    need = act + wts + bias + tmp
    phys = _physical_vmem_bytes()
    cap = int(phys * 0.75) if phys else 48 * 1024 * 1024
    limit = 2 * need + (8 << 20)
    return max(16 << 20, min(limit, cap))


# ----------------------------------------------------------------------------
# Entry points
# ----------------------------------------------------------------------------
def bottleneck1x1_2d(x2d, prep, *, tm=None, x_buffers=2,
                     vmem_limit_bytes=None, dimension_semantics=None):
    """Channels-last fast path: x2d is (M, C) with M = N*H*W (any float dtype,
    bf16 preferred). Returns (M, C) bf16."""
    M, C = x2d.shape
    assert C == prep["c_in"]
    Cp, Pp = prep["c_pad"], prep["p_pad"]

    tm = _pick_tm(M, Cp, tm)
    if vmem_limit_bytes is None:
        vmem_limit_bytes = _vmem_budget(tm, Cp, Pp, x_buffers)
    if dimension_semantics is None:
        dimension_semantics = _default_dimension_semantics()

    # bf16 at the HBM boundary (no-op if the caller already keeps bf16 activations).
    x_in = x2d if x2d.dtype == jnp.bfloat16 else x2d.astype(jnp.bfloat16)

    # Pad ONLY when needed: aligned ResNet shapes (C % 128 == 0, M % tm == 0)
    # take the zero-copy path with no extra HBM passes.
    pad_rows = (-M) % tm
    pad_cols = Cp - C
    if pad_rows or pad_cols:
        x_in = jnp.pad(x_in, ((0, pad_rows), (0, pad_cols)))
    Mp = M + pad_rows
    grid = (Mp // tm,)

    row = lambda i: (i, 0)
    full = lambda i: (0, 0)
    inv = pl.Buffered(1)   # grid-invariant operands: single buffer
    if x_buffers == 2:
        x_spec = pl.BlockSpec((tm, Cp), row)
    else:
        x_spec = pl.BlockSpec((tm, Cp), row, pipeline_mode=pl.Buffered(x_buffers))

    out = pl.pallas_call(
        bottleneck1x1_kernel,
        out_shape=jax.ShapeDtypeStruct((Mp, Cp), jnp.bfloat16),
        grid_spec=pltpu.PrefetchScalarGridSpec(
            num_scalar_prefetch=0,
            grid=grid,
            in_specs=[
                x_spec,                                                    # x
                pl.BlockSpec((Cp, Pp), full, pipeline_mode=inv),           # w1
                pl.BlockSpec((1, Pp), full, pipeline_mode=inv),            # b1
                pl.BlockSpec((Pp, Pp), full, pipeline_mode=inv),           # w2
                pl.BlockSpec((1, Pp), full, pipeline_mode=inv),            # b2
                pl.BlockSpec((Pp, Cp), full, pipeline_mode=inv),           # w3
                pl.BlockSpec((1, Cp), full, pipeline_mode=inv),            # b3
            ],
            out_specs=pl.BlockSpec((tm, Cp), row),
        ),
        compiler_params=pltpu.CompilerParams(
            dimension_semantics=dimension_semantics,
            vmem_limit_bytes=vmem_limit_bytes,
        ),
    )(x_in, prep["w1"], prep["b1"], prep["w2"], prep["b2"], prep["w3"], prep["b3"])

    if pad_rows or pad_cols:
        out = out[:M, :C]
    return out


def bottleneck1x1(x_nchw, prep, **kw):
    """NCHW wrapper matching the PyTorch module's I/O layout (returns x.dtype).
    TODO(synk): in a real pipeline keep activations NHWC/bf16 across layers and
    call bottleneck1x1_2d directly; these transposes are full HBM round trips."""
    N, C, H, W = x_nchw.shape
    x2d = jnp.transpose(x_nchw, (0, 2, 3, 1)).reshape(N * H * W, C)
    out2d = bottleneck1x1_2d(x2d, prep, **kw)
    out = jnp.transpose(out2d.reshape(N, H, W, C), (0, 3, 1, 2))
    return out.astype(x_nchw.dtype)


# ----------------------------------------------------------------------------
# Test harness
# ----------------------------------------------------------------------------
def make_params(key, inplanes, planes, expansion=4):
    """Raw module parameters: conv weights as (Cin, Cout) (= PyTorch weight.T)
    and BN (gamma, beta, running_mean, running_var) tuples."""
    outp = planes * expansion
    keys = jax.random.split(key, 6)
    w1 = jax.random.normal(keys[0], (inplanes, planes), jnp.float32) * 0.05
    w2 = jax.random.normal(keys[1], (planes, planes), jnp.float32) * 0.05
    w3 = jax.random.normal(keys[2], (planes, outp), jnp.float32) * 0.05

    def bn(k, c):
        kg, kb, km, kv = jax.random.split(k, 4)
        gamma = 1.0 + 0.1 * jax.random.normal(kg, (c,), jnp.float32)
        beta = 0.1 * jax.random.normal(kb, (c,), jnp.float32)
        mean = 0.1 * jax.random.normal(km, (c,), jnp.float32)
        var = 1.0 + 0.1 * jax.random.uniform(kv, (c,), jnp.float32)
        return (gamma, beta, mean, var)

    return (w1, bn(keys[3], planes), w2, bn(keys[4], planes), w3, bn(keys[5], outp))


def reference_2d(x2d, raw, eps=1e-5):
    """Pure-JAX f32 channels-last reference (original unfused module semantics)."""
    (w1, bn1, w2, bn2, w3, bn3) = raw
    x2d = x2d.astype(jnp.float32)

    def bn(h, p):
        gamma, beta, mean, var = p
        return (h - mean) / jnp.sqrt(var + eps) * gamma + beta

    h = jnp.maximum(bn(x2d @ w1, bn1), 0.0)
    h = jnp.maximum(bn(h @ w2, bn2), 0.0)
    h = bn(h @ w3, bn3)
    return jnp.maximum(h + x2d, 0.0)


def reference(x_nchw, raw, eps=1e-5):
    N, C, H, W = x_nchw.shape
    x2d = jnp.transpose(x_nchw, (0, 2, 3, 1)).reshape(-1, C)
    o = reference_2d(x2d, raw, eps)
    return jnp.transpose(o.reshape(N, H, W, C), (0, 3, 1, 2))


if __name__ == "__main__":
    key = jax.random.PRNGKey(0)
    kx, kx2, kx3, kp, kp2 = jax.random.split(key, 5)
    TOL = dict(atol=3e-2, rtol=3e-2)   # bf16 I/O + bf16 MXU inputs (intentional)

    # --- 1) NCHW wrapper, small unaligned channels (exercises channel+row pad)
    planes = 4
    inplanes = planes * 4            # residual with downsample=None needs Cin == 4*planes
    N, H, W = 2, 16, 16              # M = 512 rows
    raw = make_params(kp, inplanes, planes)
    prep = prepare_params(raw)

    x = jax.random.normal(kx, (N, inplanes, H, W), jnp.float32)
    out = jax.block_until_ready(bottleneck1x1(x, prep, tm=256))
    ref = reference(x, raw)
    assert out.shape == x.shape
    assert jnp.allclose(out.astype(jnp.float32), ref, **TOL), "mismatch vs reference (main)"

    # --- 2) Ragged row count (M = 169) exercises the row-padding path.
    x_odd = jax.random.normal(kx2, (1, inplanes, 13, 13), jnp.float32)
    out_odd = jax.block_until_ready(bottleneck1x1(x_odd, prep))
    ref_odd = reference(x_odd, raw)
    assert jnp.allclose(out_odd.astype(jnp.float32), ref_odd, **TOL), "mismatch vs reference (ragged)"

    # --- 3) Aligned fast path: C=128, M multiple of tm, bf16 input -> no pad,
    #        no slice, no cast (zero extra HBM passes around the kernel).
    raw_al = make_params(kp2, 128, 32)
    prep_al = prepare_params(raw_al)
    x2d_al = jax.random.normal(kx3, (2 * 16 * 16, 128), jnp.float32).astype(jnp.bfloat16)
    out_al = jax.block_until_ready(bottleneck1x1_2d(x2d_al, prep_al))
    ref_al = reference_2d(x2d_al, raw_al)
    assert out_al.shape == x2d_al.shape and out_al.dtype == jnp.bfloat16
    assert jnp.allclose(out_al.astype(jnp.float32), ref_al, **TOL), "mismatch vs reference (aligned bf16)"

    print("KERNEL_OK")
</pallas_src>

<mosaic_0001>
module attributes {stable_mosaic.version = 11 : i64} {
  func.func @bottleneck1x1_kernel(%arg0: i32, %arg1: memref<256x128xbf16, #tpu.memory_space<vmem>>, %arg2: memref<128x128xbf16, #tpu.memory_space<vmem>>, %arg3: memref<1x128xf32, #tpu.memory_space<vmem>>, %arg4: memref<128x128xbf16, #tpu.memory_space<vmem>>, %arg5: memref<1x128xf32, #tpu.memory_space<vmem>>, %arg6: memref<128x128xbf16, #tpu.memory_space<vmem>>, %arg7: memref<1x128xf32, #tpu.memory_space<vmem>>, %arg8: memref<256x128xbf16, #tpu.memory_space<vmem>>) attributes {dimension_semantics = [#tpu.dimension_semantics<parallel>], iteration_bounds = array<i64: 2>, scalar_prefetch = 0 : i64, scratch_operands = 0 : i64, tpu.core_type = #tpu.core_type<tc>, window_params = [{transform_indices = @transform_0, window_bounds = array<i64: 256, 128>}, {pipeline_mode = #tpu.pipeline_mode<synchronous>, transform_indices = @transform_1, window_bounds = array<i64: 128, 128>}, {pipeline_mode = #tpu.pipeline_mode<synchronous>, transform_indices = @transform_2, window_bounds = array<i64: 1, 128>}, {pipeline_mode = #tpu.pipeline_mode<synchronous>, transform_indices = @transform_3, window_bounds = array<i64: 128, 128>}, {pipeline_mode = #tpu.pipeline_mode<synchronous>, transform_indices = @transform_4, window_bounds = array<i64: 1, 128>}, {pipeline_mode = #tpu.pipeline_mode<synchronous>, transform_indices = @transform_5, window_bounds = array<i64: 128, 128>}, {pipeline_mode = #tpu.pipeline_mode<synchronous>, transform_indices = @transform_6, window_bounds = array<i64: 1, 128>}, {transform_indices = @transform_7, window_bounds = array<i64: 256, 128>}]} {
    %c0 = arith.constant 0 : index
    %c0_0 = arith.constant 0 : index
    %0 = vector.load %arg1[%c0, %c0_0] : memref<256x128xbf16, #tpu.memory_space<vmem>>, vector<256x128xbf16>
    %c0_1 = arith.constant 0 : index
    %c0_2 = arith.constant 0 : index
    %1 = vector.load %arg2[%c0_1, %c0_2] : memref<128x128xbf16, #tpu.memory_space<vmem>>, vector<128x128xbf16>
    %cst = arith.constant dense<0.000000e+00> : vector<256x128xf32>
    %2 = tpu.matmul %0, %1, %cst {dimension_numbers = #tpu.dot_dimension_numbers<[1], [0], [0], [1], [0, 0, 1, 1], [], []>} : vector<256x128xbf16>, vector<128x128xbf16>, vector<256x128xf32> -> vector<256x128xf32>
    %c0_3 = arith.constant 0 : index
    %c0_4 = arith.constant 0 : index
    %3 = vector.load %arg3[%c0_3, %c0_4] : memref<1x128xf32, #tpu.memory_space<vmem>>, vector<1x128xf32>
    %4 = vector.broadcast %3 : vector<1x128xf32> to vector<256x128xf32>
    %5 = arith.addf %2, %4 : vector<256x128xf32>
    %cst_5 = arith.constant 0.000000e+00 : f32
    %6 = vector.broadcast %cst_5 : f32 to vector<256x128xf32>
    %7 = arith.maximumf %5, %6 : vector<256x128xf32>
    %8 = arith.truncf %7 : vector<256x128xf32> to vector<256x128xbf16>
    %c0_6 = arith.constant 0 : index
    %c0_7 = arith.constant 0 : index
    %9 = vector.load %arg4[%c0_6, %c0_7] : memref<128x128xbf16, #tpu.memory_space<vmem>>, vector<128x128xbf16>
    %cst_8 = arith.constant dense<0.000000e+00> : vector<256x128xf32>
    %10 = tpu.matmul %8, %9, %cst_8 {dimension_numbers = #tpu.dot_dimension_numbers<[1], [0], [0], [1], [0, 0, 1, 1], [], []>} : vector<256x128xbf16>, vector<128x128xbf16>, vector<256x128xf32> -> vector<256x128xf32>
    %c0_9 = arith.constant 0 : index
    %c0_10 = arith.constant 0 : index
    %11 = vector.load %arg5[%c0_9, %c0_10] : memref<1x128xf32, #tpu.memory_space<vmem>>, vector<1x128xf32>
    %12 = vector.broadcast %11 : vector<1x128xf32> to vector<256x128xf32>
    %13 = arith.addf %10, %12 : vector<256x128xf32>
    %cst_11 = arith.constant 0.000000e+00 : f32
    %14 = vector.broadcast %cst_11 : f32 to vector<256x128xf32>
    %15 = arith.maximumf %13, %14 : vector<256x128xf32>
    %16 = arith.truncf %15 : vector<256x128xf32> to vector<256x128xbf16>
    %c0_12 = arith.constant 0 : index
    %c0_13 = arith.constant 0 : index
    %17 = vector.load %arg6[%c0_12, %c0_13] : memref<128x128xbf16, #tpu.memory_space<vmem>>, vector<128x128xbf16>
    %cst_14 = arith.constant dense<0.000000e+00> : vector<256x128xf32>
    %18 = tpu.matmul %16, %17, %cst_14 {dimension_numbers = #tpu.dot_dimension_numbers<[1], [0], [0], [1], [0, 0, 1, 1], [], []>} : vector<256x128xbf16>, vector<128x128xbf16>, vector<256x128xf32> -> vector<256x128xf32>
    %c0_15 = arith.constant 0 : index
    %c0_16 = arith.constant 0 : index
    %19 = vector.load %arg7[%c0_15, %c0_16] : memref<1x128xf32, #tpu.memory_space<vmem>>, vector<1x128xf32>
    %20 = vector.broadcast %19 : vector<1x128xf32> to vector<256x128xf32>
    %21 = arith.addf %18, %20 : vector<256x128xf32>
    %22 = arith.extf %0 : vector<256x128xbf16> to vector<256x128xf32>
    %23 = arith.addf %21, %22 : vector<256x128xf32>
    %cst_17 = arith.constant 0.000000e+00 : f32
    %24 = vector.broadcast %cst_17 : f32 to vector<256x128xf32>
    %25 = arith.maximumf %23, %24 : vector<256x128xf32>
    %26 = arith.truncf %25 : vector<256x128xf32> to vector<256x128xbf16>
    %c0_18 = arith.constant 0 : index
    %c0_19 = arith.constant 0 : index
    %27 = vector.load %arg8[%c0_18, %c0_19] : memref<256x128xbf16, #tpu.memory_space<vmem>>, vector<256x128xbf16>
    tpu.vector_store %arg8[%c0_18, %c0_19], %26 {strides = array<i32>} : memref<256x128xbf16, #tpu.memory_space<vmem>>, vector<256x128xbf16>,
    return
  }
  func.func @transform_0(%arg0: i32) -> (i32, i32) {
    %c0_i32 = arith.constant 0 : i32
    %c0_i32_0 = arith.constant 0 : i32
    return %arg0, %c0_i32 : i32, i32
  }
  func.func @transform_1(%arg0: i32) -> (i32, i32) {
    %c0_i32 = arith.constant 0 : i32
    %c0_i32_0 = arith.constant 0 : i32
    %c0_i32_1 = arith.constant 0 : i32
    return %c0_i32, %c0_i32_0 : i32, i32
  }
  func.func @transform_2(%arg0: i32) -> (i32, i32) {
    %c0_i32 = arith.constant 0 : i32
    %c0_i32_0 = arith.constant 0 : i32
    %c0_i32_1 = arith.constant 0 : i32
    return %c0_i32, %c0_i32_0 : i32, i32
  }
  func.func @transform_3(%arg0: i32) -> (i32, i32) {
    %c0_i32 = arith.constant 0 : i32
    %c0_i32_0 = arith.constant 0 : i32
    %c0_i32_1 = arith.constant 0 : i32
    return %c0_i32, %c0_i32_0 : i32, i32
  }
  func.func @transform_4(%arg0: i32) -> (i32, i32) {
    %c0_i32 = arith.constant 0 : i32
    %c0_i32_0 = arith.constant 0 : i32
    %c0_i32_1 = arith.constant 0 : i32
    return %c0_i32, %c0_i32_0 : i32, i32
  }
  func.func @transform_5(%arg0: i32) -> (i32, i32) {
    %c0_i32 = arith.constant 0 : i32
    %c0_i32_0 = arith.constant 0 : i32
    %c0_i32_1 = arith.constant 0 : i32
    return %c0_i32, %c0_i32_0 : i32, i32
  }
  func.func @transform_6(%arg0: i32) -> (i32, i32) {
    %c0_i32 = arith.constant 0 : i32
    %c0_i32_0 = arith.constant 0 : i32
    %c0_i32_1 = arith.constant 0 : i32
    return %c0_i32, %c0_i32_0 : i32, i32
  }
  func.func @transform_7(%arg0: i32) -> (i32, i32) {
    %c0_i32 = arith.constant 0 : i32
    %c0_i32_0 = arith.constant 0 : i32
    return %arg0, %c0_i32 : i32, i32
  }
}

</mosaic_0001>

<llo_original>
// kernel: tpu_custom_call.1
$region0: #{tpu_custom_call.1}
  #allocation0 [shape = 'u32[]', space=smem, size = 0x4, offset = 0x4, fixed_abs, tag = 'smem constant byte address 0x4 - core index']
  #allocation1 [shape = 'u32[72,128]{1,0:T(1,128)}', space=vmem, size = 0x9000, scoped, tag = 'internal scratch']
  %s0 = inlined_call_operand.hbm [shape: bf16[512,128], index: 0, kind: input, shape index: {}]
  %s1 = inlined_call_operand.hbm [shape: bf16[128,128], index: 1, kind: input, shape index: {}]
  %s2 = inlined_call_operand.vmem [shape: f32[1,128], index: 2, kind: input, shape index: {}]
  %s3 = inlined_call_operand.hbm [shape: bf16[128,128], index: 3, kind: input, shape index: {}]
  %s4 = inlined_call_operand.vmem [shape: f32[1,128], index: 4, kind: input, shape index: {}]
  %s5 = inlined_call_operand.hbm [shape: bf16[128,128], index: 5, kind: input, shape index: {}]
  %s6 = inlined_call_operand.vmem [shape: f32[1,128], index: 6, kind: input, shape index: {}]
  %s7 = inlined_call_operand.hbm [shape: bf16[512,128], index: 7, kind: output, shape index: {}]
  %s8 = sld [smem:[#allocation0]]
  $region77: #{tpu_custom_call.1} parent=0
    _
  %s10 = ssub.s32 1, %s8
  %s11 = scalar_select 0, %s10, %s8
  $region1: #{tpu_custom_call.1} parent=0
    #allocation2 [shape = 'u8[131072]{0}', space=vmem, size = 0x20000, scoped, tag = 'input window, operand 0']
    #allocation3 [shape = 's32[2]{0}', space=sflag, size = 0x8, scoped, tag = 'scoped memory for tpu_custom_call.1']
    #allocation4 [shape = 's32[2]{0}', space=sflag, size = 0x8, scoped, tag = 'scoped memory for tpu_custom_call.1']
    #allocation5 [shape = 'u8[32768]{0}', space=vmem, size = 0x8000, scoped, tag = 'input window, operand 1, single buffered']
    #allocation6 [shape = 's32[1]{0}', space=sflag, size = 0x4, scoped, tag = 'scoped memory for tpu_custom_call.1']
    #allocation7 [shape = 'u8[32768]{0}', space=vmem, size = 0x8000, scoped, tag = 'input window, operand 3, single buffered']
    #allocation8 [shape = 'u8[32768]{0}', space=vmem, size = 0x8000, scoped, tag = 'input window, operand 5, single buffered']
    #allocation9 [shape = 's32[1]{0}', space=sflag, size = 0x4, scoped, tag = 'scoped memory for tpu_custom_call.1']
    #allocation10 [shape = 'u8[131072]{0}', space=vmem, size = 0x20000, scoped, tag = 'output window, operand 0']
    %12 = vsyncpa [#allocation3], 0
    %s13 = scalar_lea.sflag [#allocation3], 1
    %14 = vsyncpa %s13, 0
    %15 = vsyncpa [#allocation6], 0
    %16 = vsyncpa [#allocation9], 0
    %17 = vsyncpa [#allocation4], 0
    %s18 = scalar_lea.sflag [#allocation4], 1
    %19 = vsyncpa %s18, 0
    loop: start=0, step=1, limit=4
    $region2: #{tpu_custom_call.1} parent=1 // loop_pre_header
      _
    $region3: #{tpu_custom_call.1} parent=1 // loop_header
      %s21 = sphi 0, %s25
      %p22 = scmp.ge.s32.totalorder %s21, 4
      %s31 = sphi 0, %s33
      %s34 = sphi 0, %s31
      %s35 = sphi 0, %s34
      %s51 = sphi 0, %s35
      %s55 = sphi 0, %s55
      %s57 = sphi 0, %s55
      %s58 = sphi 0, %s57
      %s72 = sphi 0, %s58
      %s76 = sphi 0, %s76
      %s78 = sphi 0, %s76
      %s79 = sphi 0, %s78
      %s93 = sphi 0, %s79
      %s97 = sphi 0, %s97
      %s99 = sphi 0, %s97
      %s100 = sphi 0, %s99
      %s114 = sphi 0, %s100
      %s118 = sphi 0, %s118
      %s120 = sphi 0, %s118
      %s121 = sphi 0, %s120
      %s135 = sphi 0, %s121
      %s139 = sphi 0, %s139
      %s141 = sphi 0, %s139
      %s142 = sphi 0, %s141
      %s156 = sphi 0, %s142
      %s160 = sphi 0, %s160
      %s162 = sphi 0, %s160
      %s163 = sphi 0, %s162
      %s177 = sphi 0, %s163
      %s183 = sphi 0, %s185
      %s186 = sphi 0, %s183
      %s187 = sphi 0, %s186
      %s203 = sphi 0, %s187
    $region4: #{tpu_custom_call.1} parent=1 // loop_header_branch
      %24 = sbr.rel (%p22) target = $region8
    $region5: #{tpu_custom_call.1} parent=1 // loop_body
      %s26 = ssub.s32 %s21, 1
      %s27 = ssub.s32 %s21, 2
      %s28 = sadd.s32 %s21, 1
      %s29 = ssub.s32 %s21, %s28
      %p30 = scmp.eq.s32.totalorder %s29, 0
      %s32 = sadd.s32 %s31, 1
      %s33 = scalar_select %p30, %s31, %s32
      %p36 = pneg %p30
      %p37 = scmp.eq.s32.totalorder %s21, 1
      %p38 = por %p36, %p37
      %p39 = scmp.ne.s32.totalorder %s31, %s34
      %p40 = scmp.eq.s32.totalorder %s21, 0
      %p41 = por %p39, %p40
      %p42 = scmp.ne.s32.totalorder %s31, %s34
      %p43 = scmp.eq.s32.totalorder %s26, 1
      %p44 = por %p42, %p43
      %p45 = scmp.ne.s32.totalorder %s34, %s35
      %p46 = scmp.eq.s32.totalorder %s26, 0
      %p47 = por %p45, %p46
      %p48 = scmp.ne.s32.totalorder %s34, %s35
      %p49 = scmp.eq.s32.totalorder %s27, 1
      %p50 = por %p48, %p49
      %p52 = scmp.ne.s32.totalorder %s35, %s51
      %p53 = scmp.eq.s32.totalorder %s27, 0
      %p54 = por %p52, %p53
      %s56 = sadd.s32 %s55, 1
      %p59 = scmp.eq.s32.totalorder %s21, 1
      %p60 = scmp.ne.s32.totalorder %s55, %s57
      %p61 = scmp.eq.s32.totalorder %s21, 0
      %p62 = por %p60, %p61
      %p63 = scmp.ne.s32.totalorder %s55, %s57
      %p64 = scmp.eq.s32.totalorder %s26, 1
      %p65 = por %p63, %p64
      %p66 = scmp.ne.s32.totalorder %s57, %s58
      %p67 = scmp.eq.s32.totalorder %s26, 0
      %p68 = por %p66, %p67
      %p69 = scmp.ne.s32.totalorder %s57, %s58
      %p70 = scmp.eq.s32.totalorder %s27, 1
      %p71 = por %p69, %p70
      %p73 = scmp.ne.s32.totalorder %s58, %s72
      %p74 = scmp.eq.s32.totalorder %s27, 0
      %p75 = por %p73, %p74
      %s77 = sadd.s32 %s76, 1
      %p80 = scmp.eq.s32.totalorder %s21, 1
      %p81 = scmp.ne.s32.totalorder %s76, %s78
      %p82 = scmp.eq.s32.totalorder %s21, 0
      %p83 = por %p81, %p82
      %p84 = scmp.ne.s32.totalorder %s76, %s78
      %p85 = scmp.eq.s32.totalorder %s26, 1
      %p86 = por %p84, %p85
      %p87 = scmp.ne.s32.totalorder %s78, %s79
      %p88 = scmp.eq.s32.totalorder %s26, 0
      %p89 = por %p87, %p88
      %p90 = scmp.ne.s32.totalorder %s78, %s79
      %p91 = scmp.eq.s32.totalorder %s27, 1
      %p92 = por %p90, %p91
      %p94 = scmp.ne.s32.totalorder %s79, %s93
      %p95 = scmp.eq.s32.totalorder %s27, 0
      %p96 = por %p94, %p95
      %s98 = sadd.s32 %s97, 1
      %p101 = scmp.eq.s32.totalorder %s21, 1
      %p102 = scmp.ne.s32.totalorder %s97, %s99
      %p103 = scmp.eq.s32.totalorder %s21, 0
      %p104 = por %p102, %p103
      %p105 = scmp.ne.s32.totalorder %s97, %s99
      %p106 = scmp.eq.s32.totalorder %s26, 1
      %p107 = por %p105, %p106
      %p108 = scmp.ne.s32.totalorder %s99, %s100
      %p109 = scmp.eq.s32.totalorder %s26, 0
      %p110 = por %p108, %p109
      %p111 = scmp.ne.s32.totalorder %s99, %s100
      %p112 = scmp.eq.s32.totalorder %s27, 1
      %p113 = por %p111, %p112
      %p115 = scmp.ne.s32.totalorder %s100, %s114
      %p116 = scmp.eq.s32.totalorder %s27, 0
      %p117 = por %p115, %p116
      %s119 = sadd.s32 %s118, 1
      %p122 = scmp.eq.s32.totalorder %s21, 1
      %p123 = scmp.ne.s32.totalorder %s118, %s120
      %p124 = scmp.eq.s32.totalorder %s21, 0
      %p125 = por %p123, %p124
      %p126 = scmp.ne.s32.totalorder %s118, %s120
      %p127 = scmp.eq.s32.totalorder %s26, 1
      %p128 = por %p126, %p127
      %p129 = scmp.ne.s32.totalorder %s120, %s121
      %p130 = scmp.eq.s32.totalorder %s26, 0
      %p131 = por %p129, %p130
      %p132 = scmp.ne.s32.totalorder %s120, %s121
      %p133 = scmp.eq.s32.totalorder %s27, 1
      %p134 = por %p132, %p133
      %p136 = scmp.ne.s32.totalorder %s121, %s135
      %p137 = scmp.eq.s32.totalorder %s27, 0
      %p138 = por %p136, %p137
      %s140 = sadd.s32 %s139, 1
      %p143 = scmp.eq.s32.totalorder %s21, 1
      %p144 = scmp.ne.s32.totalorder %s139, %s141
      %p145 = scmp.eq.s32.totalorder %s21, 0
      %p146 = por %p144, %p145
      %p147 = scmp.ne.s32.totalorder %s139, %s141
      %p148 = scmp.eq.s32.totalorder %s26, 1
      %p149 = por %p147, %p148
      %p150 = scmp.ne.s32.totalorder %s141, %s142
      %p151 = scmp.eq.s32.totalorder %s26, 0
      %p152 = por %p150, %p151
      %p153 = scmp.ne.s32.totalorder %s141, %s142
      %p154 = scmp.eq.s32.totalorder %s27, 1
      %p155 = por %p153, %p154
      %p157 = scmp.ne.s32.totalorder %s142, %s156
      %p158 = scmp.eq.s32.totalorder %s27, 0
      %p159 = por %p157, %p158
      %s161 = sadd.s32 %s160, 1
      %p164 = scmp.eq.s32.totalorder %s21, 1
      %p165 = scmp.ne.s32.totalorder %s160, %s162
      %p166 = scmp.eq.s32.totalorder %s21, 0
      %p167 = por %p165, %p166
      %p168 = scmp.ne.s32.totalorder %s160, %s162
      %p169 = scmp.eq.s32.totalorder %s26, 1
      %p170 = por %p168, %p169
      %p171 = scmp.ne.s32.totalorder %s162, %s163
      %p172 = scmp.eq.s32.totalorder %s26, 0
      %p173 = por %p171, %p172
      %p174 = scmp.ne.s32.totalorder %s162, %s163
      %p175 = scmp.eq.s32.totalorder %s27, 1
      %p176 = por %p174, %p175
      %p178 = scmp.ne.s32.totalorder %s163, %s177
      %p179 = scmp.eq.s32.totalorder %s27, 0
      %p180 = por %p178, %p179
      %s181 = ssub.s32 %s21, %s28
      %p182 = scmp.eq.s32.totalorder %s181, 0
      %s184 = sadd.s32 %s183, 1
      %s185 = scalar_select %p182, %s183, %s184
      %p188 = pneg %p182
      %p189 = scmp.eq.s32.totalorder %s21, 1
      %p190 = por %p188, %p189
      %p191 = scmp.ne.s32.totalorder %s183, %s186
      %p192 = scmp.eq.s32.totalorder %s21, 0
      %p193 = por %p191, %p192
      %p194 = scmp.ne.s32.totalorder %s183, %s186
      %p195 = scmp.eq.s32.totalorder %s26, 1
      %p196 = por %p194, %p195
      %p197 = scmp.ne.s32.totalorder %s186, %s187
      %p198 = scmp.eq.s32.totalorder %s26, 0
      %p199 = por %p197, %p198
      %p200 = scmp.ne.s32.totalorder %s186, %s187
      %p201 = scmp.eq.s32.totalorder %s27, 1
      %p202 = por %p200, %p201
      %p204 = scmp.ne.s32.totalorder %s187, %s203
      %p205 = scmp.eq.s32.totalorder %s27, 0
      %p206 = por %p204, %p205
      %p207 = scmp.le.s32.totalorder 1, %s21
      %p208 = scmp.lt.s32.totalorder %s21, 3
      %p209 = pnand %p207, %p208
      %p210 = pneg %p209
      // Predicated region
      $region9: #{tpu_custom_call.1} parent=5 // pred_check
        _
      $region10: #{tpu_custom_call.1} parent=5 // pred_check_branch
        %212 = sbr.rel (%p209) target = $region12
      $region11: #{tpu_custom_call.1} parent=5 // pred_region
        %s213 = ssub.s32 %s21, 1
        // Predicated region
        $region13: #{tpu_custom_call.1} parent=11 // pred_check
          %p214 = pneg %p68
        $region14: #{tpu_custom_call.1} parent=11 // pred_check_branch
          %216 = sbr.rel (%p214) target = $region16
        $region15: #{tpu_custom_call.1} parent=11 // pred_region
          %218 = vsyncadd [#allocation6], 0
          %s219 = sshll.u32 %s1, 4
          %s220 = int_to_ptr.hbm [resolvable:$true] %s219
          %s221 = sshll.u32 [#allocation5], 4
          %s222 = int_to_ptr.vmem [resolvable:$true] %s221
          %227 = dma.hbm_to_vmem [thread:$0]  %s220, 1024, %s222, [#allocation6], 64, 64, 4
        $region16: #{tpu_custom_call.1} parent=11 // pred_fallthru
          _
        // Predicated region
        $region17: #{tpu_custom_call.1} parent=11 // pred_check
          %p228 = pneg %p89
        $region18: #{tpu_custom_call.1} parent=11 // pred_check_branch
          %230 = sbr.rel (%p228) target = $region20
        $region19: #{tpu_custom_call.1} parent=11 // pred_region
          _
        $region20: #{tpu_custom_call.1} parent=11 // pred_fallthru
          _
        // Predicated region
        $region21: #{tpu_custom_call.1} parent=11 // pred_check
          %p231 = pneg %p110
        $region22: #{tpu_custom_call.1} parent=11 // pred_check_branch
          %233 = sbr.rel (%p231) target = $region24
        $region23: #{tpu_custom_call.1} parent=11 // pred_region
          %235 = vsyncadd [#allocation6], 0
          %s236 = sshll.u32 %s3, 4
          %s237 = int_to_ptr.hbm [resolvable:$true] %s236
          %s238 = sshll.u32 [#allocation7], 4
          %s239 = int_to_ptr.vmem [resolvable:$true] %s238
          %244 = dma.hbm_to_vmem [thread:$0]  %s237, 1024, %s239, [#allocation6], 64, 64, 4
        $region24: #{tpu_custom_call.1} parent=11 // pred_fallthru
          _
        // Predicated region
        $region25: #{tpu_custom_call.1} parent=11 // pred_check
          %p245 = pneg %p131
        $region26: #{tpu_custom_call.1} parent=11 // pred_check_branch
          %247 = sbr.rel (%p245) target = $region28
        $region27: #{tpu_custom_call.1} parent=11 // pred_region
          _
        $region28: #{tpu_custom_call.1} parent=11 // pred_fallthru
          _
        // Predicated region
        $region29: #{tpu_custom_call.1} parent=11 // pred_check
          %p248 = pneg %p152
        $region30: #{tpu_custom_call.1} parent=11 // pred_check_branch
          %250 = sbr.rel (%p248) target = $region32
        $region31: #{tpu_custom_call.1} parent=11 // pred_region
          %252 = vsyncadd [#allocation9], 0
          %s253 = sshll.u32 %s5, 4
          %s254 = int_to_ptr.hbm [resolvable:$true] %s253
          %s255 = sshll.u32 [#allocation8], 4
          %s256 = int_to_ptr.vmem [resolvable:$true] %s255
          %261 = dma.hbm_to_vmem [thread:$0]  %s254, 1024, %s256, [#allocation9], 64, 64, 4
        $region32: #{tpu_custom_call.1} parent=11 // pred_fallthru
          _
        // Predicated region
        $region33: #{tpu_custom_call.1} parent=11 // pred_check
          %p262 = pneg %p173
        $region34: #{tpu_custom_call.1} parent=11 // pred_check_branch
          %264 = sbr.rel (%p262) target = $region36
        $region35: #{tpu_custom_call.1} parent=11 // pred_region
          _
        $region36: #{tpu_custom_call.1} parent=11 // pred_fallthru
          _
      $region12: #{tpu_custom_call.1} parent=5 // pred_fallthru
        _
      %p265 = scmp.lt.s32.totalorder %s21, 2
      // Predicated region
      $region37: #{tpu_custom_call.1} parent=5 // pred_check
        %p266 = pneg %p265
      $region38: #{tpu_custom_call.1} parent=5 // pred_check_branch
        %268 = sbr.rel (%p266) target = $region40
      $region39: #{tpu_custom_call.1} parent=5 // pred_region
        // Predicated region
        $region41: #{tpu_custom_call.1} parent=39 // pred_check
          %p269 = pneg %p41
        $region42: #{tpu_custom_call.1} parent=39 // pred_check_branch
          %271 = sbr.rel (%p269) target = $region44
        $region43: #{tpu_custom_call.1} parent=39 // pred_region
          %s272 = sand.u32 %s31, 1
          %s273 = scalar_lea.sflag [#allocation3], %s272
          %s274 = sand.u32 %s31, 1
          %s275 = smul.addr %s274, 128
          %s276 = scalar_lea.vmem [#allocation2], %s275
          %s277 = smul.u32 32, %s21
          %279 = vsyncadd %s273, 0
          %s280 = smul.addr %s277, 4
          %s281 = scalar_lea.hbm %s0, %s280
          %s282 = sshll.u32 %s281, 4
          %s283 = int_to_ptr.hbm [resolvable:$true] %s282
          %s284 = sshll.u32 %s276, 4
          %s285 = int_to_ptr.vmem [resolvable:$true] %s284
          %290 = dma.hbm_to_vmem [thread:$0]  %s283, 2048, %s285, %s273, 64, 64, 4
        $region44: #{tpu_custom_call.1} parent=39 // pred_fallthru
          _
      $region40: #{tpu_custom_call.1} parent=5 // pred_fallthru
        _
      %p291 = scmp.le.s32.totalorder 1, %s21
      %p292 = scmp.lt.s32.totalorder %s21, 3
      %p293 = pnand %p291, %p292
      %p294 = pneg %p293
      // Predicated region
      $region45: #{tpu_custom_call.1} parent=5 // pred_check
        _
      $region46: #{tpu_custom_call.1} parent=5 // pred_check_branch
        %296 = sbr.rel (%p293) target = $region48
      $region47: #{tpu_custom_call.1} parent=5 // pred_region
        %s297 = ssub.s32 %s21, 1
        %s298 = sand.u32 %s34, 1
        %s299 = scalar_lea.sflag [#allocation3], %s298
        %s300 = sand.u32 %s34, 1
        %s301 = smul.addr %s300, 128
        %s302 = scalar_lea.vmem [#allocation2], %s301
        // Predicated region
        $region49: #{tpu_custom_call.1} parent=47 // pred_check
          %p303 = pneg %p47
        $region50: #{tpu_custom_call.1} parent=47 // pred_check_branch
          %305 = sbr.rel (%p303) target = $region52
        $region51: #{tpu_custom_call.1} parent=47 // pred_region
          %307 = dma.done %s299, 2048
        $region52: #{tpu_custom_call.1} parent=47 // pred_fallthru
          _
        // Predicated region
        $region53: #{tpu_custom_call.1} parent=47 // pred_check
          %p308 = pneg %p68
        $region54: #{tpu_custom_call.1} parent=47 // pred_check_branch
          %310 = sbr.rel (%p308) target = $region56
        $region55: #{tpu_custom_call.1} parent=47 // pred_region
          %312 = dma.done [#allocation6], 1024
        $region56: #{tpu_custom_call.1} parent=47 // pred_fallthru
          _
        // Predicated region
        $region57: #{tpu_custom_call.1} parent=47 // pred_check
          %p313 = pneg %p110
        $region58: #{tpu_custom_call.1} parent=47 // pred_check_branch
          %315 = sbr.rel (%p313) target = $region60
        $region59: #{tpu_custom_call.1} parent=47 // pred_region
          %317 = dma.done [#allocation6], 1024
        $region60: #{tpu_custom_call.1} parent=47 // pred_fallthru
          _
        // Predicated region
        $region61: #{tpu_custom_call.1} parent=47 // pred_check
          %p318 = pneg %p152
        $region62: #{tpu_custom_call.1} parent=47 // pred_check_branch
          %320 = sbr.rel (%p318) target = $region64
        $region63: #{tpu_custom_call.1} parent=47 // pred_region
          %322 = dma.done [#allocation9], 1024
        $region64: #{tpu_custom_call.1} parent=47 // pred_fallthru
          _
        %s323 = sand.u32 %s34, 1
        %s324 = scalar_lea.sflag [#allocation3], %s323
        %s325 = sand.u32 %s34, 1
        %s326 = smul.addr %s325, 128
        %s327 = scalar_lea.vmem [#allocation2], %s326
        %p328 = pneg %p47
        %p329 = pneg %p44
        %p330 = pneg %p68
        %p331 = pneg %p65
        %p332 = pneg %p89
        %p333 = pneg %p86
        %p334 = pneg %p110
        %p335 = pneg %p107
        %p336 = pneg %p131
        %p337 = pneg %p128
        %p338 = pneg %p152
        %p339 = pneg %p149
        %p340 = pneg %p173
        %p341 = pneg %p170
        %p342 = pneg %p199
        %p343 = pneg %p196
        %s344 = sand.u32 %s186, 1
        %s345 = scalar_lea.sflag [#allocation4], %s344
        %s346 = sand.u32 %s186, 1
        %s347 = smul.addr %s346, 128
        %s348 = scalar_lea.vmem [#allocation10], %s347
        %s349 = smul.u32 32, %s26
        %s350 = smul.u32 32, %s26
        %v351 = vld [vmem:[%s302] sm:$0xf]
        %v352 = vld [vmem:[%s302 + $0x4] sm:$0xf]
        %v353 = vld [vmem:[%s302 + $0x8] sm:$0xf]
        %v354 = vld [vmem:[%s302 + $0xc] sm:$0xf]
        %v355 = vld [vmem:[%s302 + $0x10] sm:$0xf]
        %v356 = vld [vmem:[%s302 + $0x14] sm:$0xf]
        %v357 = vld [vmem:[%s302 + $0x18] sm:$0xf]
        %v358 = vld [vmem:[%s302 + $0x1c] sm:$0xf]
        %v359 = vld [vmem:[%s302 + $0x20] sm:$0xf]
        %v360 = vld [vmem:[%s302 + $0x24] sm:$0xf]
        %v361 = vld [vmem:[%s302 + $0x28] sm:$0xf]
        %v362 = vld [vmem:[%s302 + $0x2c] sm:$0xf]
        %v363 = vld [vmem:[%s302 + $0x30] sm:$0xf]
        %v364 = vld [vmem:[%s302 + $0x34] sm:$0xf]
        %v365 = vld [vmem:[%s302 + $0x38] sm:$0xf]
        %v366 = vld [vmem:[%s302 + $0x3c] sm:$0xf]
        %v367 = vld [vmem:[%s302 + $0x40] sm:$0xf]
        %v368 = vld [vmem:[%s302 + $0x44] sm:$0xf]
        %v369 = vld [vmem:[%s302 + $0x48] sm:$0xf]
        %v370 = vld [vmem:[%s302 + $0x4c] sm:$0xf]
        %v371 = vld [vmem:[%s302 + $0x50] sm:$0xf]
        %v372 = vld [vmem:[%s302 + $0x54] sm:$0xf]
        %v373 = vld [vmem:[%s302 + $0x58] sm:$0xf]
        %v374 = vld [vmem:[%s302 + $0x5c] sm:$0xf]
        %v375 = vld [vmem:[%s302 + $0x60] sm:$0xf]
        %v376 = vld [vmem:[%s302 + $0x64] sm:$0xf]
        %v377 = vld [vmem:[%s302 + $0x68] sm:$0xf]
        %v378 = vld [vmem:[%s302 + $0x6c] sm:$0xf]
        %v379 = vld [vmem:[%s302 + $0x70] sm:$0xf]
        %v380 = vld [vmem:[%s302 + $0x74] sm:$0xf]
        %v381 = vld [vmem:[%s302 + $0x78] sm:$0xf]
        %v382 = vld [vmem:[%s302 + $0x7c] sm:$0xf]
        %v383 = vld [vmem:[#allocation5] sm:$0xf]
        %v384 = vld [vmem:[#allocation5 + $0x4] sm:$0xf]
        %v385 = vld [vmem:[#allocation5 + $0x8] sm:$0xf]
        %v386 = vld [vmem:[#allocation5 + $0xc] sm:$0xf]
        %v387 = vld [vmem:[#allocation5 + $0x10] sm:$0xf]
        %v388 = vld [vmem:[#allocation5 + $0x14] sm:$0xf]
        %v389 = vld [vmem:[#allocation5 + $0x18] sm:$0xf]
        %v390 = vld [vmem:[#allocation5 + $0x1c] sm:$0xf]
        %v391 = vld [vmem:[#allocation5 + $0x20] sm:$0xf]
        %v392 = vld [vmem:[#allocation5 + $0x24] sm:$0xf]
        %v393 = vld [vmem:[#allocation5 + $0x28] sm:$0xf]
        %v394 = vld [vmem:[#allocation5 + $0x2c] sm:$0xf]
        %v395 = vld [vmem:[#allocation5 + $0x30] sm:$0xf]
        %v396 = vld [vmem:[#allocation5 + $0x34] sm:$0xf]
        %v397 = vld [vmem:[#allocation5 + $0x38] sm:$0xf]
        %v398 = vld [vmem:[#allocation5 + $0x3c] sm:$0xf]
        %v399 = vld [vmem:[%s2] sm:$0x1]
        %v401 = vperm.slane %v399, 0
        %v435 = vunpack.c.l.b16 %v351
        %v436 = vunpack.c.l.b16 %v352
        %v437 = vunpack.c.l.b16 %v353
        %v438 = vunpack.c.l.b16 %v354
        %v439 = vunpack.c.l.b16 %v355
        %v440 = vunpack.c.l.b16 %v356
        %v441 = vunpack.c.l.b16 %v357
        %v442 = vunpack.c.l.b16 %v358
        %v443 = vunpack.c.l.b16 %v359
        %v444 = vunpack.c.l.b16 %v360
        %v445 = vunpack.c.l.b16 %v361
        %v446 = vunpack.c.l.b16 %v362
        %v447 = vunpack.c.l.b16 %v363
        %v448 = vunpack.c.l.b16 %v364
        %v449 = vunpack.c.l.b16 %v365
        %v450 = vunpack.c.l.b16 %v366
        %v451 = vunpack.c.l.b16 %v367
        %v452 = vunpack.c.l.b16 %v368
        %v453 = vunpack.c.l.b16 %v369
        %v454 = vunpack.c.l.b16 %v370
        %v455 = vunpack.c.l.b16 %v371
        %v456 = vunpack.c.l.b16 %v372
        %v457 = vunpack.c.l.b16 %v373
        %v458 = vunpack.c.l.b16 %v374
        %v459 = vunpack.c.l.b16 %v375
        %v460 = vunpack.c.l.b16 %v376
        %v461 = vunpack.c.l.b16 %v377
        %v462 = vunpack.c.l.b16 %v378
        %v463 = vunpack.c.l.b16 %v379
        %v464 = vunpack.c.l.b16 %v380
        %v465 = vunpack.c.l.b16 %v381
        %v466 = vunpack.c.l.b16 %v382
        %v467 = vpack.c.b16 %v436, %v435
        %v468 = vpack.c.b16 %v438, %v437
        %v469 = vpack.c.b16 %v440, %v439
        %v470 = vpack.c.b16 %v442, %v441
        %v471 = vpack.c.b16 %v444, %v443
        %v472 = vpack.c.b16 %v446, %v445
        %v473 = vpack.c.b16 %v448, %v447
        %v474 = vpack.c.b16 %v450, %v449
        %v475 = vpack.c.b16 %v452, %v451
        %v476 = vpack.c.b16 %v454, %v453
        %v477 = vpack.c.b16 %v456, %v455
        %v478 = vpack.c.b16 %v458, %v457
        %v479 = vpack.c.b16 %v460, %v459
        %v480 = vpack.c.b16 %v462, %v461
        %v481 = vpack.c.b16 %v464, %v463
        %v482 = vpack.c.b16 %v466, %v465
        %v515 = vunpack.c.l.b16 %v383
        %v516 = vunpack.c.l.b16 %v384
        %v517 = vunpack.c.l.b16 %v385
        %v518 = vunpack.c.l.b16 %v386
        %v519 = vunpack.c.l.b16 %v387
        %v520 = vunpack.c.l.b16 %v388
        %v521 = vunpack.c.l.b16 %v389
        %v522 = vunpack.c.l.b16 %v390
        %v523 = vunpack.c.l.b16 %v391
        %v524 = vunpack.c.l.b16 %v392
        %v525 = vunpack.c.l.b16 %v393
        %v526 = vunpack.c.l.b16 %v394
        %v527 = vunpack.c.l.b16 %v395
        %v528 = vunpack.c.l.b16 %v396
        %v529 = vunpack.c.l.b16 %v397
        %v530 = vunpack.c.l.b16 %v398
        %v531 = vpack.c.b16 %v516, %v515
        %v532 = vpack.c.b16 %v518, %v517
        %v533 = vpack.c.b16 %v520, %v519
        %v534 = vpack.c.b16 %v522, %v521
        %v535 = vpack.c.b16 %v524, %v523
        %v536 = vpack.c.b16 %v526, %v525
        %v537 = vpack.c.b16 %v528, %v527
        %v538 = vpack.c.b16 %v530, %v529
        %547 = vmatpush.bf16.msra.mxu0 %v538
        %548 = vmatpush.bf16.msra.mxu0 %v537
        %549 = vmatpush.bf16.msra.mxu0 %v536
        %550 = vmatpush.bf16.msra.mxu0 %v535
        %551 = vmatpush.bf16.msra.mxu0 %v534
        %552 = vmatpush.bf16.msra.mxu0 %v533
        %553 = vmatpush.bf16.msra.mxu0 %v532
        %554 = vmatpush.bf16.msra.mxu0 %v531
        %555 = vmatmul.bf16.gmra.mxu0 %v467
        %v556 = vpop.f32.mrf.mxu0
        %v557 = vadd.f32 %v401, %v556
        %v558 = vpop.f32.mrf.mxu0
        %v559 = vadd.f32 %v401, %v558
        %560 = vmatmul.bf16.gmra.mxu0 %v468
        %v561 = vpop.f32.mrf.mxu0
        %v562 = vadd.f32 %v401, %v561
        %v563 = vpop.f32.mrf.mxu0
        %v564 = vadd.f32 %v401, %v563
        %565 = vmatmul.bf16.gmra.mxu0 %v469
        %v566 = vpop.f32.mrf.mxu0
        %v567 = vadd.f32 %v401, %v566
        %v568 = vpop.f32.mrf.mxu0
        %v569 = vadd.f32 %v401, %v568
        %570 = vmatmul.bf16.gmra.mxu0 %v470
        %v571 = vpop.f32.mrf.mxu0
        %v572 = vadd.f32 %v401, %v571
        %v573 = vpop.f32.mrf.mxu0
        %v574 = vadd.f32 %v401, %v573
        %575 = vmatmul.bf16.gmra.mxu0 %v471
        %v576 = vpop.f32.mrf.mxu0
        %v577 = vadd.f32 %v401, %v576
        %v578 = vpop.f32.mrf.mxu0
        %v579 = vadd.f32 %v401, %v578
        %580 = vmatmul.bf16.gmra.mxu0 %v472
        %v581 = vpop.f32.mrf.mxu0
        %v582 = vadd.f32 %v401, %v581
        %v583 = vpop.f32.mrf.mxu0
        %v584 = vadd.f32 %v401, %v583
        %585 = vmatmul.bf16.gmra.mxu0 %v473
        %v586 = vpop.f32.mrf.mxu0
        %v587 = vadd.f32 %v401, %v586
        %v588 = vpop.f32.mrf.mxu0
        %v589 = vadd.f32 %v401, %v588
        %590 = vmatmul.bf16.gmra.mxu0 %v474
        %v591 = vpop.f32.mrf.mxu0
        %v592 = vadd.f32 %v401, %v591
        %v593 = vpop.f32.mrf.mxu0
        %v594 = vadd.f32 %v401, %v593
        %595 = vmatmul.bf16.gmra.mxu0 %v475
        %v596 = vpop.f32.mrf.mxu0
        %v597 = vadd.f32 %v401, %v596
        %v598 = vpop.f32.mrf.mxu0
        %v599 = vadd.f32 %v401, %v598
        %600 = vmatmul.bf16.gmra.mxu0 %v476
        %v601 = vpop.f32.mrf.mxu0
        %v602 = vadd.f32 %v401, %v601
        %v603 = vpop.f32.mrf.mxu0
        %v604 = vadd.f32 %v401, %v603
        %605 = vmatmul.bf16.gmra.mxu0 %v477
        %v606 = vpop.f32.mrf.mxu0
        %v607 = vadd.f32 %v401, %v606
        %v608 = vpop.f32.mrf.mxu0
        %v609 = vadd.f32 %v401, %v608
        %610 = vmatmul.bf16.gmra.mxu0 %v478
        %v611 = vpop.f32.mrf.mxu0
        %v612 = vadd.f32 %v401, %v611
        %v613 = vpop.f32.mrf.mxu0
        %v614 = vadd.f32 %v401, %v613
        %615 = vmatmul.bf16.gmra.mxu0 %v479
        %v616 = vpop.f32.mrf.mxu0
        %v617 = vadd.f32 %v401, %v616
        %v618 = vpop.f32.mrf.mxu0
        %v619 = vadd.f32 %v401, %v618
        %620 = vmatmul.bf16.gmra.mxu0 %v480
        %v621 = vpop.f32.mrf.mxu0
        %v622 = vadd.f32 %v401, %v621
        %v623 = vpop.f32.mrf.mxu0
        %v624 = vadd.f32 %v401, %v623
        %625 = vmatmul.bf16.gmra.mxu0 %v481
        %v626 = vpop.f32.mrf.mxu0
        %v627 = vadd.f32 %v401, %v626
        %v628 = vpop.f32.mrf.mxu0
        %v629 = vadd.f32 %v401, %v628
        %630 = vmatmul.bf16.gmra.mxu0 %v482
        %v631 = vpop.f32.mrf.mxu0
        %v632 = vadd.f32 %v401, %v631
        %v633 = vpop.f32.mrf.mxu0
        %v634 = vadd.f32 %v401, %v633
        %635 = vdwg.mxu0
        %v636 = vmax.f32 %v557, 0.0
        %v637 = vmax.f32 %v559, 0.0
        %v638 = vmax.f32 %v562, 0.0
        %v639 = vmax.f32 %v564, 0.0
        %v640 = vmax.f32 %v567, 0.0
        %v641 = vmax.f32 %v569, 0.0
        %v642 = vmax.f32 %v572, 0.0
        %v643 = vmax.f32 %v574, 0.0
        %v644 = vmax.f32 %v577, 0.0
        %v645 = vmax.f32 %v579, 0.0
        %v646 = vmax.f32 %v582, 0.0
        %v647 = vmax.f32 %v584, 0.0
        %v648 = vmax.f32 %v587, 0.0
        %v649 = vmax.f32 %v589, 0.0
        %v650 = vmax.f32 %v592, 0.0
        %v651 = vmax.f32 %v594, 0.0
        %v652 = vmax.f32 %v597, 0.0
        %v653 = vmax.f32 %v599, 0.0
        %v654 = vmax.f32 %v602, 0.0
        %v655 = vmax.f32 %v604, 0.0
        %v656 = vmax.f32 %v607, 0.0
        %v657 = vmax.f32 %v609, 0.0
        %v658 = vmax.f32 %v612, 0.0
        %v659 = vmax.f32 %v614, 0.0
        %v660 = vmax.f32 %v617, 0.0
        %v661 = vmax.f32 %v619, 0.0
        %v662 = vmax.f32 %v622, 0.0
        %v663 = vmax.f32 %v624, 0.0
        %v664 = vmax.f32 %v627, 0.0
        %v665 = vmax.f32 %v629, 0.0
        %v666 = vmax.f32 %v632, 0.0
        %v667 = vmax.f32 %v634, 0.0
        %v668 = vpack.c.bf16 %v637, %v636
        %v669 = vpack.c.bf16 %v639, %v638
        %v670 = vpack.c.bf16 %v641, %v640
        %v671 = vpack.c.bf16 %v643, %v642
        %v672 = vpack.c.bf16 %v645, %v644
        %v673 = vpack.c.bf16 %v647, %v646
        %v674 = vpack.c.bf16 %v649, %v648
        %v675 = vpack.c.bf16 %v651, %v650
        %v676 = vpack.c.bf16 %v653, %v652
        %v677 = vpack.c.bf16 %v655, %v654
        %v678 = vpack.c.bf16 %v657, %v656
        %v679 = vpack.c.bf16 %v659, %v658
        %v680 = vpack.c.bf16 %v661, %v660
        %v681 = vpack.c.bf16 %v663, %v662
        %v682 = vpack.c.bf16 %v665, %v664
        %v683 = vpack.c.bf16 %v667, %v666
        %v684 = vld [vmem:[#allocation7] sm:$0xf]
        %v685 = vld [vmem:[#allocation7 + $0x4] sm:$0xf]
        %v686 = vld [vmem:[#allocation7 + $0x8] sm:$0xf]
        %v687 = vld [vmem:[#allocation7 + $0xc] sm:$0xf]
        %v688 = vld [vmem:[#allocation7 + $0x10] sm:$0xf]
        %v689 = vld [vmem:[#allocation7 + $0x14] sm:$0xf]
        %v690 = vld [vmem:[#allocation7 + $0x18] sm:$0xf]
        %v691 = vld [vmem:[#allocation7 + $0x1c] sm:$0xf]
        %v692 = vld [vmem:[#allocation7 + $0x20] sm:$0xf]
        %v693 = vld [vmem:[#allocation7 + $0x24] sm:$0xf]
        %v694 = vld [vmem:[#allocation7 + $0x28] sm:$0xf]
        %v695 = vld [vmem:[#allocation7 + $0x2c] sm:$0xf]
        %v696 = vld [vmem:[#allocation7 + $0x30] sm:$0xf]
        %v697 = vld [vmem:[#allocation7 + $0x34] sm:$0xf]
        %v698 = vld [vmem:[#allocation7 + $0x38] sm:$0xf]
        %v699 = vld [vmem:[#allocation7 + $0x3c] sm:$0xf]
        %v700 = vld [vmem:[%s4] sm:$0x1]
        %v702 = vperm.slane %v700, 0
        %v720 = vunpack.c.l.b16 %v684
        %v721 = vunpack.c.l.b16 %v685
        %v722 = vunpack.c.l.b16 %v686
        %v723 = vunpack.c.l.b16 %v687
        %v724 = vunpack.c.l.b16 %v688
        %v725 = vunpack.c.l.b16 %v689
        %v726 = vunpack.c.l.b16 %v690
        %v727 = vunpack.c.l.b16 %v691
        %v728 = vunpack.c.l.b16 %v692
        %v729 = vunpack.c.l.b16 %v693
        %v730 = vunpack.c.l.b16 %v694
        %v731 = vunpack.c.l.b16 %v695
        %v732 = vunpack.c.l.b16 %v696
        %v733 = vunpack.c.l.b16 %v697
        %v734 = vunpack.c.l.b16 %v698
        %v735 = vunpack.c.l.b16 %v699
        %v736 = vpack.c.b16 %v721, %v720
        %v737 = vpack.c.b16 %v723, %v722
        %v738 = vpack.c.b16 %v725, %v724
        %v739 = vpack.c.b16 %v727, %v726
        %v740 = vpack.c.b16 %v729, %v728
        %v741 = vpack.c.b16 %v731, %v730
        %v742 = vpack.c.b16 %v733, %v732
        %v743 = vpack.c.b16 %v735, %v734
        %752 = vmatpush.bf16.msra.mxu0 %v743
        %753 = vmatpush.bf16.msra.mxu0 %v742
        %754 = vmatpush.bf16.msra.mxu0 %v741
        %755 = vmatpush.bf16.msra.mxu0 %v740
        %756 = vmatpush.bf16.msra.mxu0 %v739
        %757 = vmatpush.bf16.msra.mxu0 %v738
        %758 = vmatpush.bf16.msra.mxu0 %v737
        %759 = vmatpush.bf16.msra.mxu0 %v736
        %760 = vmatmul.bf16.gmra.mxu0 %v668
        %v761 = vpop.f32.mrf.mxu0
        %v762 = vadd.f32 %v702, %v761
        %v763 = vpop.f32.mrf.mxu0
        %v764 = vadd.f32 %v702, %v763
        %765 = vmatmul.bf16.gmra.mxu0 %v669
        %v766 = vpop.f32.mrf.mxu0
        %v767 = vadd.f32 %v702, %v766
        %v768 = vpop.f32.mrf.mxu0
        %v769 = vadd.f32 %v702, %v768
        %770 = vmatmul.bf16.gmra.mxu0 %v670
        %v771 = vpop.f32.mrf.mxu0
        %v772 = vadd.f32 %v702, %v771
        %v773 = vpop.f32.mrf.mxu0
        %v774 = vadd.f32 %v702, %v773
        %775 = vmatmul.bf16.gmra.mxu0 %v671
        %v776 = vpop.f32.mrf.mxu0
        %v777 = vadd.f32 %v702, %v776
        %v778 = vpop.f32.mrf.mxu0
        %v779 = vadd.f32 %v702, %v778
        %780 = vmatmul.bf16.gmra.mxu0 %v672
        %v781 = vpop.f32.mrf.mxu0
        %v782 = vadd.f32 %v702, %v781
        %v783 = vpop.f32.mrf.mxu0
        %v784 = vadd.f32 %v702, %v783
        %785 = vmatmul.bf16.gmra.mxu0 %v673
        %v786 = vpop.f32.mrf.mxu0
        %v787 = vadd.f32 %v702, %v786
        %v788 = vpop.f32.mrf.mxu0
        %v789 = vadd.f32 %v702, %v788
        %790 = vmatmul.bf16.gmra.mxu0 %v674
        %v791 = vpop.f32.mrf.mxu0
        %v792 = vadd.f32 %v702, %v791
        %v793 = vpop.f32.mrf.mxu0
        %v794 = vadd.f32 %v702, %v793
        %795 = vmatmul.bf16.gmra.mxu0 %v675
        %v796 = vpop.f32.mrf.mxu0
        %v797 = vadd.f32 %v702, %v796
        %v798 = vpop.f32.mrf.mxu0
        %v799 = vadd.f32 %v702, %v798
        %800 = vmatmul.bf16.gmra.mxu0 %v676
        %v801 = vpop.f32.mrf.mxu0
        %v802 = vadd.f32 %v702, %v801
        %v803 = vpop.f32.mrf.mxu0
        %v804 = vadd.f32 %v702, %v803
        %805 = vmatmul.bf16.gmra.mxu0 %v677
        %v806 = vpop.f32.mrf.mxu0
        %v807 = vadd.f32 %v702, %v806
        %v808 = vpop.f32.mrf.mxu0
        %v809 = vadd.f32 %v702, %v808
        %810 = vmatmul.bf16.gmra.mxu0 %v678
        %v811 = vpop.f32.mrf.mxu0
        %v812 = vadd.f32 %v702, %v811
        %v813 = vpop.f32.mrf.mxu0
        %v814 = vadd.f32 %v702, %v813
        %815 = vmatmul.bf16.gmra.mxu0 %v679
        %v816 = vpop.f32.mrf.mxu0
        %v817 = vadd.f32 %v702, %v816
        %v818 = vpop.f32.mrf.mxu0
        %v819 = vadd.f32 %v702, %v818
        %820 = vmatmul.bf16.gmra.mxu0 %v680
        %v821 = vpop.f32.mrf.mxu0
        %v822 = vadd.f32 %v702, %v821
        %v823 = vpop.f32.mrf.mxu0
        %v824 = vadd.f32 %v702, %v823
        %825 = vmatmul.bf16.gmra.mxu0 %v681
        %v826 = vpop.f32.mrf.mxu0
        %v827 = vadd.f32 %v702, %v826
        %v828 = vpop.f32.mrf.mxu0
        %v829 = vadd.f32 %v702, %v828
        %830 = vmatmul.bf16.gmra.mxu0 %v682
        %v831 = vpop.f32.mrf.mxu0
        %v832 = vadd.f32 %v702, %v831
        %v833 = vpop.f32.mrf.mxu0
        %v834 = vadd.f32 %v702, %v833
        %835 = vmatmul.bf16.gmra.mxu0 %v683
        %v836 = vpop.f32.mrf.mxu0
        %v837 = vadd.f32 %v702, %v836
        %v838 = vpop.f32.mrf.mxu0
        %v839 = vadd.f32 %v702, %v838
        %840 = vdwg.mxu0
        %v841 = vmax.f32 %v762, 0.0
        %v842 = vmax.f32 %v764, 0.0
        %v843 = vmax.f32 %v767, 0.0
        %v844 = vmax.f32 %v769, 0.0
        %v845 = vmax.f32 %v772, 0.0
        %v846 = vmax.f32 %v774, 0.0
        %v847 = vmax.f32 %v777, 0.0
        %v848 = vmax.f32 %v779, 0.0
        %v849 = vmax.f32 %v782, 0.0
        %v850 = vmax.f32 %v784, 0.0
        %v851 = vmax.f32 %v787, 0.0
        %v852 = vmax.f32 %v789, 0.0
        %v853 = vmax.f32 %v792, 0.0
        %v854 = vmax.f32 %v794, 0.0
        %v855 = vmax.f32 %v797, 0.0
        %v856 = vmax.f32 %v799, 0.0
        %v857 = vmax.f32 %v802, 0.0
        %v858 = vmax.f32 %v804, 0.0
        %v859 = vmax.f32 %v807, 0.0
        %v860 = vmax.f32 %v809, 0.0
        %v861 = vmax.f32 %v812, 0.0
        %v862 = vmax.f32 %v814, 0.0
        %v863 = vmax.f32 %v817, 0.0
        %v864 = vmax.f32 %v819, 0.0
        %v865 = vmax.f32 %v822, 0.0
        %v866 = vmax.f32 %v824, 0.0
        %v867 = vmax.f32 %v827, 0.0
        %v868 = vmax.f32 %v829, 0.0
        %v869 = vmax.f32 %v832, 0.0
        %v870 = vmax.f32 %v834, 0.0
        %v871 = vmax.f32 %v837, 0.0
        %v872 = vmax.f32 %v839, 0.0
        %v873 = vpack.c.bf16 %v842, %v841
        %v874 = vpack.c.bf16 %v844, %v843
        %v875 = vpack.c.bf16 %v846, %v845
        %v876 = vpack.c.bf16 %v848, %v847
        %v877 = vpack.c.bf16 %v850, %v849
        %v878 = vpack.c.bf16 %v852, %v851
        %v879 = vpack.c.bf16 %v854, %v853
        %v880 = vpack.c.bf16 %v856, %v855
        %v881 = vpack.c.bf16 %v858, %v857
        %v882 = vpack.c.bf16 %v860, %v859
        %v883 = vpack.c.bf16 %v862, %v861
        %v884 = vpack.c.bf16 %v864, %v863
        %v885 = vpack.c.bf16 %v866, %v865
        %v886 = vpack.c.bf16 %v868, %v867
        %v887 = vpack.c.bf16 %v870, %v869
        %v888 = vpack.c.bf16 %v872, %v871
        %v889 = vld [vmem:[#allocation8] sm:$0xf]
        %v890 = vld [vmem:[#allocation8 + $0x4] sm:$0xf]
        %v891 = vld [vmem:[#allocation8 + $0x8] sm:$0xf]
        %v892 = vld [vmem:[#allocation8 + $0xc] sm:$0xf]
        %v893 = vld [vmem:[#allocation8 + $0x10] sm:$0xf]
        %v894 = vld [vmem:[#allocation8 + $0x14] sm:$0xf]
        %v895 = vld [vmem:[#allocation8 + $0x18] sm:$0xf]
        %v896 = vld [vmem:[#allocation8 + $0x1c] sm:$0xf]
        %v897 = vld [vmem:[#allocation8 + $0x20] sm:$0xf]
        %v898 = vld [vmem:[#allocation8 + $0x24] sm:$0xf]
        %v899 = vld [vmem:[#allocation8 + $0x28] sm:$0xf]
        %v900 = vld [vmem:[#allocation8 + $0x2c] sm:$0xf]
        %v901 = vld [vmem:[#allocation8 + $0x30] sm:$0xf]
        %v902 = vld [vmem:[#allocation8 + $0x34] sm:$0xf]
        %v903 = vld [vmem:[#allocation8 + $0x38] sm:$0xf]
        %v904 = vld [vmem:[#allocation8 + $0x3c] sm:$0xf]
        %v905 = vld [vmem:[%s6] sm:$0x1]
        %v907 = vperm.slane %v905, 0
        %v925 = vunpack.c.l.b16 %v889
        %v926 = vunpack.c.l.b16 %v890
        %v927 = vunpack.c.l.b16 %v891
        %v928 = vunpack.c.l.b16 %v892
        %v929 = vunpack.c.l.b16 %v893
        %v930 = vunpack.c.l.b16 %v894
        %v931 = vunpack.c.l.b16 %v895
        %v932 = vunpack.c.l.b16 %v896
        %v933 = vunpack.c.l.b16 %v897
        %v934 = vunpack.c.l.b16 %v898
        %v935 = vunpack.c.l.b16 %v899
        %v936 = vunpack.c.l.b16 %v900
        %v937 = vunpack.c.l.b16 %v901
        %v938 = vunpack.c.l.b16 %v902
        %v939 = vunpack.c.l.b16 %v903
        %v940 = vunpack.c.l.b16 %v904
        %v941 = vpack.c.b16 %v926, %v925
        %v942 = vpack.c.b16 %v928, %v927
        %v943 = vpack.c.b16 %v930, %v929
        %v944 = vpack.c.b16 %v932, %v931
        %v945 = vpack.c.b16 %v934, %v933
        %v946 = vpack.c.b16 %v936, %v935
        %v947 = vpack.c.b16 %v938, %v937
        %v948 = vpack.c.b16 %v940, %v939
        %957 = vmatpush.bf16.msra.mxu0 %v948
        %958 = vmatpush.bf16.msra.mxu0 %v947
        %959 = vmatpush.bf16.msra.mxu0 %v946
        %960 = vmatpush.bf16.msra.mxu0 %v945
        %961 = vmatpush.bf16.msra.mxu0 %v944
        %962 = vmatpush.bf16.msra.mxu0 %v943
        %963 = vmatpush.bf16.msra.mxu0 %v942
        %964 = vmatpush.bf16.msra.mxu0 %v941
        %965 = vmatmul.bf16.gmra.mxu0 %v873
        %v966 = vpop.f32.mrf.mxu0
        %v967 = vadd.f32 %v907, %v966
        %v968 = vpop.f32.mrf.mxu0
        %v969 = vadd.f32 %v907, %v968
        %970 = vmatmul.bf16.gmra.mxu0 %v874
        %v971 = vpop.f32.mrf.mxu0
        %v972 = vadd.f32 %v907, %v971
        %v973 = vpop.f32.mrf.mxu0
        %v974 = vadd.f32 %v907, %v973
        %975 = vmatmul.bf16.gmra.mxu0 %v875
        %v976 = vpop.f32.mrf.mxu0
        %v977 = vadd.f32 %v907, %v976
        %v978 = vpop.f32.mrf.mxu0
        %v979 = vadd.f32 %v907, %v978
        %980 = vmatmul.bf16.gmra.mxu0 %v876
        %v981 = vpop.f32.mrf.mxu0
        %v982 = vadd.f32 %v907, %v981
        %v983 = vpop.f32.mrf.mxu0
        %v984 = vadd.f32 %v907, %v983
        %985 = vmatmul.bf16.gmra.mxu0 %v877
        %v986 = vpop.f32.mrf.mxu0
        %v987 = vadd.f32 %v907, %v986
        %v988 = vpop.f32.mrf.mxu0
        %v989 = vadd.f32 %v907, %v988
        %990 = vmatmul.bf16.gmra.mxu0 %v878
        %v991 = vpop.f32.mrf.mxu0
        %v992 = vadd.f32 %v907, %v991
        %v993 = vpop.f32.mrf.mxu0
        %v994 = vadd.f32 %v907, %v993
        %995 = vmatmul.bf16.gmra.mxu0 %v879
        %v996 = vpop.f32.mrf.mxu0
        %v997 = vadd.f32 %v907, %v996
        %v998 = vpop.f32.mrf.mxu0
        %v999 = vadd.f32 %v907, %v998
        %1000 = vmatmul.bf16.gmra.mxu0 %v880
        %v1001 = vpop.f32.mrf.mxu0
        %v1002 = vadd.f32 %v907, %v1001
        %v1003 = vpop.f32.mrf.mxu0
        %v1004 = vadd.f32 %v907, %v1003
        %1005 = vmatmul.bf16.gmra.mxu0 %v881
        %v1006 = vpop.f32.mrf.mxu0
        %v1007 = vadd.f32 %v907, %v1006
        %v1008 = vpop.f32.mrf.mxu0
        %v1009 = vadd.f32 %v907, %v1008
        %1010 = vmatmul.bf16.gmra.mxu0 %v882
        %v1011 = vpop.f32.mrf.mxu0
        %v1012 = vadd.f32 %v907, %v1011
        %v1013 = vpop.f32.mrf.mxu0
        %v1014 = vadd.f32 %v907, %v1013
        %1015 = vmatmul.bf16.gmra.mxu0 %v883
        %v1016 = vpop.f32.mrf.mxu0
        %v1017 = vadd.f32 %v907, %v1016
        %v1018 = vpop.f32.mrf.mxu0
        %v1019 = vadd.f32 %v907, %v1018
        %1020 = vmatmul.bf16.gmra.mxu0 %v884
        %v1021 = vpop.f32.mrf.mxu0
        %v1022 = vadd.f32 %v907, %v1021
        %v1023 = vpop.f32.mrf.mxu0
        %v1024 = vadd.f32 %v907, %v1023
        %1025 = vmatmul.bf16.gmra.mxu0 %v885
        %v1026 = vpop.f32.mrf.mxu0
        %v1027 = vadd.f32 %v907, %v1026
        %v1028 = vpop.f32.mrf.mxu0
        %v1029 = vadd.f32 %v907, %v1028
        %1030 = vmatmul.bf16.gmra.mxu0 %v886
        %v1031 = vpop.f32.mrf.mxu0
        %v1032 = vadd.f32 %v907, %v1031
        %v1033 = vpop.f32.mrf.mxu0
        %v1034 = vadd.f32 %v907, %v1033
        %1035 = vmatmul.bf16.gmra.mxu0 %v887
        %v1036 = vpop.f32.mrf.mxu0
        %v1037 = vadd.f32 %v907, %v1036
        %v1038 = vpop.f32.mrf.mxu0
        %v1039 = vadd.f32 %v907, %v1038
        %1040 = vmatmul.bf16.gmra.mxu0 %v888
        %v1041 = vpop.f32.mrf.mxu0
        %v1042 = vadd.f32 %v907, %v1041
        %v1043 = vpop.f32.mrf.mxu0
        %v1044 = vadd.f32 %v907, %v1043
        %1045 = vdwg.mxu0
        %v1046 = vunpack.c.l.bf16 %v351
        %v1047 = vunpack.c.l.bf16 %v352
        %v1048 = vunpack.c.l.bf16 %v353
        %v1049 = vunpack.c.l.bf16 %v354
        %v1050 = vunpack.c.l.bf16 %v355
        %v1051 = vunpack.c.l.bf16 %v356
        %v1052 = vunpack.c.l.bf16 %v357
        %v1053 = vunpack.c.l.bf16 %v358
        %v1054 = vunpack.c.l.bf16 %v359
        %v1055 = vunpack.c.l.bf16 %v360
        %v1056 = vunpack.c.l.bf16 %v361
        %v1057 = vunpack.c.l.bf16 %v362
        %v1058 = vunpack.c.l.bf16 %v363
        %v1059 = vunpack.c.l.bf16 %v364
        %v1060 = vunpack.c.l.bf16 %v365
        %v1061 = vunpack.c.l.bf16 %v366
        %v1062 = vunpack.c.l.bf16 %v367
        %v1063 = vunpack.c.l.bf16 %v368
        %v1064 = vunpack.c.l.bf16 %v369
        %v1065 = vunpack.c.l.bf16 %v370
        %v1066 = vunpack.c.l.bf16 %v371
        %v1067 = vunpack.c.l.bf16 %v372
        %v1068 = vunpack.c.l.bf16 %v373
        %v1069 = vunpack.c.l.bf16 %v374
        %v1070 = vunpack.c.l.bf16 %v375
        %v1071 = vunpack.c.l.bf16 %v376
        %v1072 = vunpack.c.l.bf16 %v377
        %v1073 = vunpack.c.l.bf16 %v378
        %v1074 = vunpack.c.l.bf16 %v379
        %v1075 = vunpack.c.l.bf16 %v380
        %v1076 = vunpack.c.l.bf16 %v381
        %v1077 = vunpack.c.l.bf16 %v382
        %v1078 = vadd.f32 %v967, %v1046
        %v1079 = vadd.f32 %v969, %v1047
        %v1080 = vadd.f32 %v972, %v1048
        %v1081 = vadd.f32 %v974, %v1049
        %v1082 = vadd.f32 %v977, %v1050
        %v1083 = vadd.f32 %v979, %v1051
        %v1084 = vadd.f32 %v982, %v1052
        %v1085 = vadd.f32 %v984, %v1053
        %v1086 = vadd.f32 %v987, %v1054
        %v1087 = vadd.f32 %v989, %v1055
        %v1088 = vadd.f32 %v992, %v1056
        %v1089 = vadd.f32 %v994, %v1057
        %v1090 = vadd.f32 %v997, %v1058
        %v1091 = vadd.f32 %v999, %v1059
        %v1092 = vadd.f32 %v1002, %v1060
        %v1093 = vadd.f32 %v1004, %v1061
        %v1094 = vadd.f32 %v1007, %v1062
        %v1095 = vadd.f32 %v1009, %v1063
        %v1096 = vadd.f32 %v1012, %v1064
        %v1097 = vadd.f32 %v1014, %v1065
        %v1098 = vadd.f32 %v1017, %v1066
        %v1099 = vadd.f32 %v1019, %v1067
        %v1100 = vadd.f32 %v1022, %v1068
        %v1101 = vadd.f32 %v1024, %v1069
        %v1102 = vadd.f32 %v1027, %v1070
        %v1103 = vadd.f32 %v1029, %v1071
        %v1104 = vadd.f32 %v1032, %v1072
        %v1105 = vadd.f32 %v1034, %v1073
        %v1106 = vadd.f32 %v1037, %v1074
        %v1107 = vadd.f32 %v1039, %v1075
        %v1108 = vadd.f32 %v1042, %v1076
        %v1109 = vadd.f32 %v1044, %v1077
        %v1110 = vmax.f32 %v1078, 0.0
        %v1111 = vmax.f32 %v1079, 0.0
        %v1112 = vmax.f32 %v1080, 0.0
        %v1113 = vmax.f32 %v1081, 0.0
        %v1114 = vmax.f32 %v1082, 0.0
        %v1115 = vmax.f32 %v1083, 0.0
        %v1116 = vmax.f32 %v1084, 0.0
        %v1117 = vmax.f32 %v1085, 0.0
        %v1118 = vmax.f32 %v1086, 0.0
        %v1119 = vmax.f32 %v1087, 0.0
        %v1120 = vmax.f32 %v1088, 0.0
        %v1121 = vmax.f32 %v1089, 0.0
        %v1122 = vmax.f32 %v1090, 0.0
        %v1123 = vmax.f32 %v1091, 0.0
        %v1124 = vmax.f32 %v1092, 0.0
        %v1125 = vmax.f32 %v1093, 0.0
        %v1126 = vmax.f32 %v1094, 0.0
        %v1127 = vmax.f32 %v1095, 0.0
        %v1128 = vmax.f32 %v1096, 0.0
        %v1129 = vmax.f32 %v1097, 0.0
        %v1130 = vmax.f32 %v1098, 0.0
        %v1131 = vmax.f32 %v1099, 0.0
        %v1132 = vmax.f32 %v1100, 0.0
        %v1133 = vmax.f32 %v1101, 0.0
        %v1134 = vmax.f32 %v1102, 0.0
        %v1135 = vmax.f32 %v1103, 0.0
        %v1136 = vmax.f32 %v1104, 0.0
        %v1137 = vmax.f32 %v1105, 0.0
        %v1138 = vmax.f32 %v1106, 0.0
        %v1139 = vmax.f32 %v1107, 0.0
        %v1140 = vmax.f32 %v1108, 0.0
        %v1141 = vmax.f32 %v1109, 0.0
        %v1142 = vpack.c.bf16 %v1110, %v1110
        %v1143 = vpack.c.bf16 %v1111, %v1111
        %v1144 = vpack.c.bf16 %v1112, %v1112
        %v1145 = vpack.c.bf16 %v1113, %v1113
        %v1146 = vpack.c.bf16 %v1114, %v1114
        %v1147 = vpack.c.bf16 %v1115, %v1115
        %v1148 = vpack.c.bf16 %v1116, %v1116
        %v1149 = vpack.c.bf16 %v1117, %v1117
        %v1150 = vpack.c.bf16 %v1118, %v1118
        %v1151 = vpack.c.bf16 %v1119, %v1119
        %v1152 = vpack.c.bf16 %v1120, %v1120
        %v1153 = vpack.c.bf16 %v1121, %v1121
        %v1154 = vpack.c.bf16 %v1122, %v1122
        %v1155 = vpack.c.bf16 %v1123, %v1123
        %v1156 = vpack.c.bf16 %v1124, %v1124
        %v1157 = vpack.c.bf16 %v1125, %v1125
        %v1158 = vpack.c.bf16 %v1126, %v1126
        %v1159 = vpack.c.bf16 %v1127, %v1127
        %v1160 = vpack.c.bf16 %v1128, %v1128
        %v1161 = vpack.c.bf16 %v1129, %v1129
        %v1162 = vpack.c.bf16 %v1130, %v1130
        %v1163 = vpack.c.bf16 %v1131, %v1131
        %v1164 = vpack.c.bf16 %v1132, %v1132
        %v1165 = vpack.c.bf16 %v1133, %v1133
        %v1166 = vpack.c.bf16 %v1134, %v1134
        %v1167 = vpack.c.bf16 %v1135, %v1135
        %v1168 = vpack.c.bf16 %v1136, %v1136
        %v1169 = vpack.c.bf16 %v1137, %v1137
        %v1170 = vpack.c.bf16 %v1138, %v1138
        %v1171 = vpack.c.bf16 %v1139, %v1139
        %v1172 = vpack.c.bf16 %v1140, %v1140
        %v1173 = vpack.c.bf16 %v1141, %v1141
        %1174 = vst [vmem:[%s348] sm:$0xf] %v1142
        %1175 = vst [vmem:[%s348 + $0x4] sm:$0xf] %v1143
        %1176 = vst [vmem:[%s348 + $0x8] sm:$0xf] %v1144
        %1177 = vst [vmem:[%s348 + $0xc] sm:$0xf] %v1145
        %1178 = vst [vmem:[%s348 + $0x10] sm:$0xf] %v1146
        %1179 = vst [vmem:[%s348 + $0x14] sm:$0xf] %v1147
        %1180 = vst [vmem:[%s348 + $0x18] sm:$0xf] %v1148
        %1181 = vst [vmem:[%s348 + $0x1c] sm:$0xf] %v1149
        %1182 = vst [vmem:[%s348 + $0x20] sm:$0xf] %v1150
        %1183 = vst [vmem:[%s348 + $0x24] sm:$0xf] %v1151
        %1184 = vst [vmem:[%s348 + $0x28] sm:$0xf] %v1152
        %1185 = vst [vmem:[%s348 + $0x2c] sm:$0xf] %v1153
        %1186 = vst [vmem:[%s348 + $0x30] sm:$0xf] %v1154
        %1187 = vst [vmem:[%s348 + $0x34] sm:$0xf] %v1155
        %1188 = vst [vmem:[%s348 + $0x38] sm:$0xf] %v1156
        %1189 = vst [vmem:[%s348 + $0x3c] sm:$0xf] %v1157
        %1190 = vst [vmem:[%s348 + $0x40] sm:$0xf] %v1158
        %1191 = vst [vmem:[%s348 + $0x44] sm:$0xf] %v1159
        %1192 = vst [vmem:[%s348 + $0x48] sm:$0xf] %v1160
        %1193 = vst [vmem:[%s348 + $0x4c] sm:$0xf] %v1161
        %1194 = vst [vmem:[%s348 + $0x50] sm:$0xf] %v1162
        %1195 = vst [vmem:[%s348 + $0x54] sm:$0xf] %v1163
        %1196 = vst [vmem:[%s348 + $0x58] sm:$0xf] %v1164
        %1197 = vst [vmem:[%s348 + $0x5c] sm:$0xf] %v1165
        %1198 = vst [vmem:[%s348 + $0x60] sm:$0xf] %v1166
        %1199 = vst [vmem:[%s348 + $0x64] sm:$0xf] %v1167
        %1200 = vst [vmem:[%s348 + $0x68] sm:$0xf] %v1168
        %1201 = vst [vmem:[%s348 + $0x6c] sm:$0xf] %v1169
        %1202 = vst [vmem:[%s348 + $0x70] sm:$0xf] %v1170
        %1203 = vst [vmem:[%s348 + $0x74] sm:$0xf] %v1171
        %1204 = vst [vmem:[%s348 + $0x78] sm:$0xf] %v1172
        %1205 = vst [vmem:[%s348 + $0x7c] sm:$0xf] %v1173
        %s1206 = sand.u32 %s186, 1
        %s1207 = scalar_lea.sflag [#allocation4], %s1206
        %s1208 = sand.u32 %s186, 1
        %s1209 = smul.addr %s1208, 128
        %s1210 = scalar_lea.vmem [#allocation10], %s1209
        // Predicated region
        $region65: #{tpu_custom_call.1} parent=47 // pred_check
          %p1211 = pneg %p196
        $region66: #{tpu_custom_call.1} parent=47 // pred_check_branch
          %1213 = sbr.rel (%p1211) target = $region68
        $region67: #{tpu_custom_call.1} parent=47 // pred_region
          %s1214 = smul.u32 32, %s26
          %1216 = vsyncadd %s1207, 0
          %s1217 = smul.addr %s1214, 4
          %s1218 = scalar_lea.hbm %s7, %s1217
          %s1219 = sshll.u32 %s1210, 4
          %s1220 = int_to_ptr.vmem [resolvable:$true] %s1219
          %s1221 = sshll.u32 %s1218, 4
          %s1222 = int_to_ptr.hbm [resolvable:$true] %s1221
          %1227 = dma.vmem_to_hbm [thread:$0]  %s1220, 2048, %s1222, %s1207, 64, 64, 4
        $region68: #{tpu_custom_call.1} parent=47 // pred_fallthru
          _
      $region48: #{tpu_custom_call.1} parent=5 // pred_fallthru
        _
      %p1228 = scmp.le.s32.totalorder 2, %s21
      // Predicated region
      $region69: #{tpu_custom_call.1} parent=5 // pred_check
        %p1229 = pneg %p1228
      $region70: #{tpu_custom_call.1} parent=5 // pred_check_branch
        %1231 = sbr.rel (%p1229) target = $region72
      $region71: #{tpu_custom_call.1} parent=5 // pred_region
        %s1232 = ssub.s32 %s21, 2
        // Predicated region
        $region73: #{tpu_custom_call.1} parent=71 // pred_check
          %p1233 = pneg %p202
        $region74: #{tpu_custom_call.1} parent=71 // pred_check_branch
          %1235 = sbr.rel (%p1233) target = $region76
        $region75: #{tpu_custom_call.1} parent=71 // pred_region
          %s1236 = sand.u32 %s187, 1
          %s1237 = scalar_lea.sflag [#allocation4], %s1236
          %s1238 = sand.u32 %s187, 1
          %s1239 = smul.addr %s1238, 128
          %s1240 = scalar_lea.vmem [#allocation10], %s1239
          %1242 = dma.done %s1237, 2048
        $region76: #{tpu_custom_call.1} parent=71 // pred_fallthru
          _
      $region72: #{tpu_custom_call.1} parent=5 // pred_fallthru
        _
    $region6: #{tpu_custom_call.1} parent=1 // loop_footer
      %s25 = sadd.s32 1, %s21
    $region7: #{tpu_custom_call.1} parent=1 // loop_footer_branch
      %20 = sbr.rel target = $region3
    $region8: #{tpu_custom_call.1} parent=1 // loop_exit
      _
    %1243 = vsyncpa [#allocation3], 1
    %s1244 = scalar_lea.sflag [#allocation3], 1
    %1245 = vsyncpa %s1244, 1
    %1246 = vsyncpa [#allocation6], 1
    %1247 = vsyncpa [#allocation9], 1
    %1248 = vsyncpa [#allocation4], 1
    %s1249 = scalar_lea.sflag [#allocation4], 1
    %1250 = vsyncpa %s1249, 1

</llo_original>
